<compile_context>
chip_gen: v7x
topology: tpu7x:2x2x1
jax: 0.10.0
libtpu: 0.0.40
codegen_flags: <defaults>
</compile_context>

<pallas_src>
import functools

import jax
import jax.numpy as jnp
from jax.experimental import pallas as pl
from jax.experimental.pallas import tpu as pltpu


def _round_up(a, b):
    return ((a + b - 1) // b) * b


def _dgm_kernel(x_ref, xw_ref, xb_ref,
                wzgr_ref, bzgr_ref,
                hw_ref, hb_ref,
                ow_ref, ob_ref,
                y_ref, *, L, Hd, s1_width):
    """One grid step == one batch tile; all L layers unrolled in-kernel."""
    act = jnp.tanh
    mm_dtype = xw_ref.dtype          # bf16 or f32 operands; f32 accumulation

    # One wide MXU pass for every x-side projection (x is loop-invariant):
    # columns [0:Hd] = S_1, then per layer a 4*Hd slab of [Z|G|R|H] U-terms.
    xp = (jnp.dot(x_ref[...], xw_ref[...],
                  preferred_element_type=jnp.float32)
          + xb_ref[...])                                   # (TN, XW) f32

    S = xp[:, 0:Hd]                  # S = S_1(x)  (module applies no activation here)

    for i in range(L):               # static unroll over the DGM layers
        off = s1_width + i * 4 * Hd
        u = xp[:, off:off + 4 * Hd]  # [Z|G|R|H] U-terms, lane-aligned slab

        # Fused, lane-dense S-side projection for Z/G/R (last Hd cols are zero).
        w = (jnp.dot(S.astype(mm_dtype), wzgr_ref[i],
                     preferred_element_type=jnp.float32)
             + bzgr_ref[i])                                # (TN, 4*Hd) f32
        pre = u + w                  # lanes [3Hd:4Hd] stay == H's U-term

        zgr = act(pre)               # ONE wide tanh for Z, G, R (H lanes unused)
        Z = zgr[:, 0 * Hd:1 * Hd]
        G = zgr[:, 1 * Hd:2 * Hd]
        R = zgr[:, 2 * Hd:3 * Hd]

        H = act(pre[:, 3 * Hd:4 * Hd]
                + jnp.dot((S * R).astype(mm_dtype), hw_ref[i],
                          preferred_element_type=jnp.float32)
                + hb_ref[i])

        S = (1.0 - G) * H + Z * S

    # Lane-dense (zero-padded) output projection; pad columns sliced off outside.
    y_ref[...] = (jnp.dot(S.astype(mm_dtype), ow_ref[...],
                          preferred_element_type=jnp.float32)
                  + ob_ref[...]).astype(y_ref.dtype)


def dgm_net_pallas(params, x, *, tile_n=1024, matmul_dtype=jnp.float32):
    """params: dict of per-gate weights (see init_params). x: (N, D_in) f32."""
    N, D_in = x.shape
    L, _, Hd = params["zu"].shape
    D_out = params["ow"].shape[1]
    f32 = jnp.float32
    mm_dtype = jnp.dtype(matmul_dtype)

    s1_width = _round_up(Hd, 128)            # keep per-layer slabs 128-lane aligned
    out_width = _round_up(D_out, 128)        # lane-dense output stores
    XW = s1_width + L * 4 * Hd

    # ---- fused x-side weights: [ S1(pad) | layer0 Z|G|R|H | layer1 ... ] ----
    s1w_pad = jnp.pad(params["s1w"], ((0, 0), (0, s1_width - Hd)))
    u_layers = jnp.concatenate(
        [params["zu"], params["gu"], params["ru"], params["hu"]], axis=-1)  # (L,D_in,4Hd)
    u_flat = jnp.transpose(u_layers, (1, 0, 2)).reshape(D_in, L * 4 * Hd)
    xw = jnp.concatenate([s1w_pad, u_flat], axis=-1)                        # (D_in, XW)
    xb = jnp.concatenate(
        [jnp.pad(params["s1b"], ((0, 0), (0, s1_width - Hd))),
         jnp.zeros((1, L * 4 * Hd), f32)], axis=-1)                          # (1, XW)

    # ---- fused, lane-dense S-side weights for Z/G/R (padded to 4*Hd lanes) ----
    wzgr = jnp.concatenate(
        [params["zw"], params["gw"], params["rw"],
         jnp.zeros((L, Hd, Hd), f32)], axis=-1)                              # (L,Hd,4Hd)
    bzgr = jnp.concatenate(
        [params["zb"], params["gb"], params["rb"],
         jnp.zeros((L, 1, Hd), f32)], axis=-1)                               # (L,1,4Hd)

    hw, hb = params["hw"], params["hb"]

    # ---- lane-dense output projection ----
    ow = jnp.pad(params["ow"], ((0, 0), (0, out_width - D_out)))
    ob = jnp.pad(params["ob"], ((0, 0), (0, out_width - D_out)))

    # bf16 matmul operands (weights cast once); biases / elementwise stay f32.
    xw = xw.astype(mm_dtype)
    wzgr = wzgr.astype(mm_dtype)
    hw = hw.astype(mm_dtype)
    ow = ow.astype(mm_dtype)
    x_in = x.astype(mm_dtype)

    # ---- batch tiling: big tiles, but >=2 grid steps when the batch allows
    # (so the "parallel" axis spans both v7x TensorCores). ----
    sub = 16 if mm_dtype == jnp.bfloat16 else 8
    TN = _round_up(min(tile_n, max(N, sub)), sub)
    N_pad = _round_up(N, TN)
    if N_pad // TN == 1 and N > 2 * sub:
        TN = _round_up(pl.cdiv(N, 2), sub)
        N_pad = _round_up(N, TN)
    if N_pad != N:
        x_in = jnp.pad(x_in, ((0, N_pad - N), (0, 0)))
    n_tiles = N_pad // TN

    row2 = lambda n: (n, 0)
    const2 = lambda n: (0, 0)
    const3 = lambda n: (0, 0, 0)

    flops = 2 * N_pad * (D_in * XW + L * (Hd * 4 * Hd + Hd * Hd) + Hd * out_width)
    transcendentals = N_pad * L * 5 * Hd
    bytes_accessed = (x_in.nbytes + xw.nbytes + xb.nbytes + wzgr.nbytes
                      + bzgr.nbytes + hw.nbytes + hb.nbytes + ow.nbytes
                      + ob.nbytes + N_pad * out_width * 4)

    out = pl.pallas_call(
        functools.partial(_dgm_kernel, L=L, Hd=Hd, s1_width=s1_width),
        out_shape=jax.ShapeDtypeStruct((N_pad, out_width), jnp.float32),
        grid_spec=pltpu.PrefetchScalarGridSpec(
            num_scalar_prefetch=0,
            grid=(n_tiles,),
            in_specs=[
                pl.BlockSpec((TN, D_in), row2),            # x (batch-tiled)
                pl.BlockSpec((D_in, XW), const2),          # fused x-side weights
                pl.BlockSpec((1, XW), const2),             # fused x-side bias (S_1)
                pl.BlockSpec((L, Hd, 4 * Hd), const3),     # fused S-side W [Z|G|R|0]
                pl.BlockSpec((L, 1, 4 * Hd), const3),      # fused S-side b [Z|G|R|0]
                pl.BlockSpec((L, Hd, Hd), const3),         # H_W
                pl.BlockSpec((L, 1, Hd), const3),          # H_W bias
                pl.BlockSpec((Hd, out_width), const2),     # output weight (lane-padded)
                pl.BlockSpec((1, out_width), const2),      # output bias (lane-padded)
            ],
            out_specs=pl.BlockSpec((TN, out_width), row2),
        ),
        compiler_params=pltpu.CompilerParams(
            dimension_semantics=("parallel",),
            vmem_limit_bytes=48 * 1024 * 1024),
        cost_estimate=pl.CostEstimate(
            flops=flops,
            transcendentals=transcendentals,
            bytes_accessed=bytes_accessed),
    )(x_in, xw, xb, wzgr, bzgr, hw, hb, ow, ob)

    return out[:N, :D_out]


def init_params(key, input_size, hidden_size, num_hidden_layers, output_size):
    """Deterministic init mimicking nn.Linear's U(-1/sqrt(fan_in), +) scheme.

    Weights are stored transposed relative to PyTorch (in_features, out_features)
    so the kernel uses plain  v @ W  matmuls.
    """
    L = num_hidden_layers - 1
    keys = iter(jax.random.split(key, 64))

    def u(shape, fan_in):
        bound = 1.0 / jnp.sqrt(jnp.float32(fan_in))
        return jax.random.uniform(next(keys), shape, jnp.float32, -bound, bound)

    p = {
        "s1w": u((input_size, hidden_size), input_size),
        "s1b": u((1, hidden_size), input_size),
        "ow": u((hidden_size, output_size), hidden_size),
        "ob": u((1, output_size), hidden_size),
    }
    for name in ("z", "g", "r", "h"):
        p[name + "u"] = u((L, input_size, hidden_size), input_size)
        p[name + "w"] = u((L, hidden_size, hidden_size), hidden_size)
        p[name + "b"] = u((L, 1, hidden_size), hidden_size)
    return p


def dgm_net_reference(params, x, matmul_dtype=jnp.float32):
    """Pure-JAX reference matching the PyTorch forward (activation = tanh).

    matmul_dtype mirrors the kernel's bf16-operand option (f32 accumulation).
    """
    L = params["zu"].shape[0]
    md = jnp.dtype(matmul_dtype)

    def mm(a, b):
        return jnp.dot(a.astype(md), b.astype(md),
                       preferred_element_type=jnp.float32)

    S = mm(x, params["s1w"]) + params["s1b"]
    for i in range(L):
        Z = jnp.tanh(mm(x, params["zu"][i]) + mm(S, params["zw"][i]) + params["zb"][i])
        G = jnp.tanh(mm(x, params["gu"][i]) + mm(S, params["gw"][i]) + params["gb"][i])
        R = jnp.tanh(mm(x, params["ru"][i]) + mm(S, params["rw"][i]) + params["rb"][i])
        H = jnp.tanh(mm(x, params["hu"][i]) + mm(S * R, params["hw"][i]) + params["hb"][i])
        S = (1.0 - G) * H + Z * S
    return mm(S, params["ow"]) + params["ob"]


if __name__ == "__main__":
    # Small shapes consistent with a DGM PDE solver: x = (t, spatial coords).
    batch = 8
    input_size = 4
    hidden_size = 32
    num_hidden_layers = 4    # -> L = 3 recurrent DGM layers
    output_size = 1

    key = jax.random.PRNGKey(0)
    k_params, k_x = jax.random.split(key)
    params = init_params(k_params, input_size, hidden_size,
                         num_hidden_layers, output_size)
    x = jax.random.normal(k_x, (batch, input_size), jnp.float32)

    # ---- f32 matmul operands: strict check against the reference ----
    y = jax.block_until_ready(dgm_net_pallas(params, x))
    y_ref = dgm_net_reference(params, x)
    assert y.shape == (batch, output_size)
    assert jnp.allclose(y, y_ref, atol=1e-5, rtol=1e-5), "f32 mismatch vs reference"

    # ---- bf16 matmul operands (f32 accumulate / elementwise): check against a
    # reference that applies the same operand casts ----
    y_bf16 = jax.block_until_ready(
        dgm_net_pallas(params, x, matmul_dtype=jnp.bfloat16))
    y_ref_bf16 = dgm_net_reference(params, x, matmul_dtype=jnp.bfloat16)
    assert y_bf16.shape == (batch, output_size)
    assert jnp.allclose(y_bf16, y_ref_bf16, atol=1e-3, rtol=1e-3), \
        "bf16 mismatch vs bf16 reference"

    print("KERNEL_OK")
</pallas_src>

<mosaic_0001>
module attributes {stable_mosaic.version = 11 : i64} {
  func.func @_dgm_kernel(%arg0: i32, %arg1: memref<8x4xf32, #tpu.memory_space<vmem>>, %arg2: memref<4x512xf32, #tpu.memory_space<vmem>>, %arg3: memref<1x512xf32, #tpu.memory_space<vmem>>, %arg4: memref<3x32x128xf32, #tpu.memory_space<vmem>>, %arg5: memref<3x1x128xf32, #tpu.memory_space<vmem>>, %arg6: memref<3x32x32xf32, #tpu.memory_space<vmem>>, %arg7: memref<3x1x32xf32, #tpu.memory_space<vmem>>, %arg8: memref<32x128xf32, #tpu.memory_space<vmem>>, %arg9: memref<1x128xf32, #tpu.memory_space<vmem>>, %arg10: memref<8x128xf32, #tpu.memory_space<vmem>>) attributes {dimension_semantics = [#tpu.dimension_semantics<parallel>], iteration_bounds = array<i64: 1>, scalar_prefetch = 0 : i64, scratch_operands = 0 : i64, tpu.core_type = #tpu.core_type<tc>, window_params = [{transform_indices = @transform_0, window_bounds = array<i64: 8, 4>}, {pipeline_mode = #tpu.pipeline_mode<synchronous>, transform_indices = @transform_1, window_bounds = array<i64: 4, 512>}, {pipeline_mode = #tpu.pipeline_mode<synchronous>, transform_indices = @transform_2, window_bounds = array<i64: 1, 512>}, {pipeline_mode = #tpu.pipeline_mode<synchronous>, transform_indices = @transform_3, window_bounds = array<i64: 3, 32, 128>}, {pipeline_mode = #tpu.pipeline_mode<synchronous>, transform_indices = @transform_4, window_bounds = array<i64: 3, 1, 128>}, {pipeline_mode = #tpu.pipeline_mode<synchronous>, transform_indices = @transform_5, window_bounds = array<i64: 3, 32, 32>}, {pipeline_mode = #tpu.pipeline_mode<synchronous>, transform_indices = @transform_6, window_bounds = array<i64: 3, 1, 32>}, {pipeline_mode = #tpu.pipeline_mode<synchronous>, transform_indices = @transform_7, window_bounds = array<i64: 32, 128>}, {pipeline_mode = #tpu.pipeline_mode<synchronous>, transform_indices = @transform_8, window_bounds = array<i64: 1, 128>}, {transform_indices = @transform_9, window_bounds = array<i64: 8, 128>}]} {
    %c0 = arith.constant 0 : index
    %c0_0 = arith.constant 0 : index
    %0 = vector.load %arg1[%c0, %c0_0] : memref<8x4xf32, #tpu.memory_space<vmem>>, vector<8x4xf32>
    %c0_1 = arith.constant 0 : index
    %c0_2 = arith.constant 0 : index
    %1 = vector.load %arg2[%c0_1, %c0_2] : memref<4x512xf32, #tpu.memory_space<vmem>>, vector<4x512xf32>
    %cst = arith.constant dense<0.000000e+00> : vector<8x512xf32>
    %2 = tpu.matmul %0, %1, %cst {dimension_numbers = #tpu.dot_dimension_numbers<[1], [0], [0], [1], [0, 0, 1, 1], [], []>} : vector<8x4xf32>, vector<4x512xf32>, vector<8x512xf32> -> vector<8x512xf32>
    %c0_3 = arith.constant 0 : index
    %c0_4 = arith.constant 0 : index
    %3 = vector.load %arg3[%c0_3, %c0_4] : memref<1x512xf32, #tpu.memory_space<vmem>>, vector<1x512xf32>
    %4 = vector.broadcast %3 : vector<1x512xf32> to vector<8x512xf32>
    %5 = arith.addf %2, %4 : vector<8x512xf32>
    %6 = vector.extract_strided_slice %5 {offsets = [0, 0], sizes = [8, 32], strides = [1, 1]} : vector<8x512xf32> to vector<8x32xf32>
    %7 = vector.extract_strided_slice %5 {offsets = [0, 128], sizes = [8, 128], strides = [1, 1]} : vector<8x512xf32> to vector<8x128xf32>
    %c0_5 = arith.constant 0 : index
    %c0_6 = arith.constant 0 : index
    %c0_7 = arith.constant 0 : index
    %8 = vector.load %arg4[%c0_5, %c0_6, %c0_7] : memref<3x32x128xf32, #tpu.memory_space<vmem>>, vector<1x32x128xf32>
    %9 = vector.shape_cast %8 : vector<1x32x128xf32> to vector<32x128xf32>
    %cst_8 = arith.constant dense<0.000000e+00> : vector<8x128xf32>
    %10 = tpu.matmul %6, %9, %cst_8 {dimension_numbers = #tpu.dot_dimension_numbers<[1], [0], [0], [1], [0, 0, 1, 1], [], []>} : vector<8x32xf32>, vector<32x128xf32>, vector<8x128xf32> -> vector<8x128xf32>
    %c0_9 = arith.constant 0 : index
    %c0_10 = arith.constant 0 : index
    %c0_11 = arith.constant 0 : index
    %11 = vector.load %arg5[%c0_9, %c0_10, %c0_11] : memref<3x1x128xf32, #tpu.memory_space<vmem>>, vector<1x1x128xf32>
    %12 = vector.shape_cast %11 : vector<1x1x128xf32> to vector<1x128xf32>
    %13 = vector.broadcast %12 : vector<1x128xf32> to vector<8x128xf32>
    %14 = arith.addf %10, %13 : vector<8x128xf32>
    %15 = arith.addf %7, %14 : vector<8x128xf32>
    %16 = math.tanh %15 : vector<8x128xf32>
    %17 = vector.extract_strided_slice %16 {offsets = [0, 0], sizes = [8, 32], strides = [1, 1]} : vector<8x128xf32> to vector<8x32xf32>
    %18 = vector.extract_strided_slice %16 {offsets = [0, 32], sizes = [8, 32], strides = [1, 1]} : vector<8x128xf32> to vector<8x32xf32>
    %19 = vector.extract_strided_slice %16 {offsets = [0, 64], sizes = [8, 32], strides = [1, 1]} : vector<8x128xf32> to vector<8x32xf32>
    %20 = vector.extract_strided_slice %15 {offsets = [0, 96], sizes = [8, 32], strides = [1, 1]} : vector<8x128xf32> to vector<8x32xf32>
    %21 = arith.mulf %6, %19 : vector<8x32xf32>
    %c0_12 = arith.constant 0 : index
    %c0_13 = arith.constant 0 : index
    %c0_14 = arith.constant 0 : index
    %22 = vector.load %arg6[%c0_12, %c0_13, %c0_14] : memref<3x32x32xf32, #tpu.memory_space<vmem>>, vector<1x32x32xf32>
    %23 = vector.shape_cast %22 : vector<1x32x32xf32> to vector<32x32xf32>
    %cst_15 = arith.constant dense<0.000000e+00> : vector<8x32xf32>
    %24 = tpu.matmul %21, %23, %cst_15 {dimension_numbers = #tpu.dot_dimension_numbers<[1], [0], [0], [1], [0, 0, 1, 1], [], []>} : vector<8x32xf32>, vector<32x32xf32>, vector<8x32xf32> -> vector<8x32xf32>
    %25 = arith.addf %20, %24 : vector<8x32xf32>
    %c0_16 = arith.constant 0 : index
    %c0_17 = arith.constant 0 : index
    %c0_18 = arith.constant 0 : index
    %26 = vector.load %arg7[%c0_16, %c0_17, %c0_18] : memref<3x1x32xf32, #tpu.memory_space<vmem>>, vector<1x1x32xf32>
    %27 = vector.shape_cast %26 : vector<1x1x32xf32> to vector<1x32xf32>
    %28 = vector.broadcast %27 : vector<1x32xf32> to vector<8x32xf32>
    %29 = arith.addf %25, %28 : vector<8x32xf32>
    %30 = math.tanh %29 : vector<8x32xf32>
    %cst_19 = arith.constant 1.000000e+00 : f32
    %31 = vector.broadcast %cst_19 : f32 to vector<8x32xf32>
    %32 = arith.subf %31, %18 : vector<8x32xf32>
    %33 = arith.mulf %32, %30 : vector<8x32xf32>
    %34 = arith.mulf %17, %6 : vector<8x32xf32>
    %35 = arith.addf %33, %34 : vector<8x32xf32>
    %36 = vector.extract_strided_slice %5 {offsets = [0, 256], sizes = [8, 128], strides = [1, 1]} : vector<8x512xf32> to vector<8x128xf32>
    %c1 = arith.constant 1 : index
    %c0_20 = arith.constant 0 : index
    %c0_21 = arith.constant 0 : index
    %37 = vector.load %arg4[%c1, %c0_20, %c0_21] : memref<3x32x128xf32, #tpu.memory_space<vmem>>, vector<1x32x128xf32>
    %38 = vector.shape_cast %37 : vector<1x32x128xf32> to vector<32x128xf32>
    %cst_22 = arith.constant dense<0.000000e+00> : vector<8x128xf32>
    %39 = tpu.matmul %35, %38, %cst_22 {dimension_numbers = #tpu.dot_dimension_numbers<[1], [0], [0], [1], [0, 0, 1, 1], [], []>} : vector<8x32xf32>, vector<32x128xf32>, vector<8x128xf32> -> vector<8x128xf32>
    %c1_23 = arith.constant 1 : index
    %c0_24 = arith.constant 0 : index
    %c0_25 = arith.constant 0 : index
    %40 = vector.load %arg5[%c1_23, %c0_24, %c0_25] : memref<3x1x128xf32, #tpu.memory_space<vmem>>, vector<1x1x128xf32>
    %41 = vector.shape_cast %40 : vector<1x1x128xf32> to vector<1x128xf32>
    %42 = vector.broadcast %41 : vector<1x128xf32> to vector<8x128xf32>
    %43 = arith.addf %39, %42 : vector<8x128xf32>
    %44 = arith.addf %36, %43 : vector<8x128xf32>
    %45 = math.tanh %44 : vector<8x128xf32>
    %46 = vector.extract_strided_slice %45 {offsets = [0, 0], sizes = [8, 32], strides = [1, 1]} : vector<8x128xf32> to vector<8x32xf32>
    %47 = vector.extract_strided_slice %45 {offsets = [0, 32], sizes = [8, 32], strides = [1, 1]} : vector<8x128xf32> to vector<8x32xf32>
    %48 = vector.extract_strided_slice %45 {offsets = [0, 64], sizes = [8, 32], strides = [1, 1]} : vector<8x128xf32> to vector<8x32xf32>
    %49 = vector.extract_strided_slice %44 {offsets = [0, 96], sizes = [8, 32], strides = [1, 1]} : vector<8x128xf32> to vector<8x32xf32>
    %50 = arith.mulf %35, %48 : vector<8x32xf32>
    %c1_26 = arith.constant 1 : index
    %c0_27 = arith.constant 0 : index
    %c0_28 = arith.constant 0 : index
    %51 = vector.load %arg6[%c1_26, %c0_27, %c0_28] : memref<3x32x32xf32, #tpu.memory_space<vmem>>, vector<1x32x32xf32>
    %52 = vector.shape_cast %51 : vector<1x32x32xf32> to vector<32x32xf32>
    %cst_29 = arith.constant dense<0.000000e+00> : vector<8x32xf32>
    %53 = tpu.matmul %50, %52, %cst_29 {dimension_numbers = #tpu.dot_dimension_numbers<[1], [0], [0], [1], [0, 0, 1, 1], [], []>} : vector<8x32xf32>, vector<32x32xf32>, vector<8x32xf32> -> vector<8x32xf32>
    %54 = arith.addf %49, %53 : vector<8x32xf32>
    %c1_30 = arith.constant 1 : index
    %c0_31 = arith.constant 0 : index
    %c0_32 = arith.constant 0 : index
    %55 = vector.load %arg7[%c1_30, %c0_31, %c0_32] : memref<3x1x32xf32, #tpu.memory_space<vmem>>, vector<1x1x32xf32>
    %56 = vector.shape_cast %55 : vector<1x1x32xf32> to vector<1x32xf32>
    %57 = vector.broadcast %56 : vector<1x32xf32> to vector<8x32xf32>
    %58 = arith.addf %54, %57 : vector<8x32xf32>
    %59 = math.tanh %58 : vector<8x32xf32>
    %cst_33 = arith.constant 1.000000e+00 : f32
    %60 = vector.broadcast %cst_33 : f32 to vector<8x32xf32>
    %61 = arith.subf %60, %47 : vector<8x32xf32>
    %62 = arith.mulf %61, %59 : vector<8x32xf32>
    %63 = arith.mulf %46, %35 : vector<8x32xf32>
    %64 = arith.addf %62, %63 : vector<8x32xf32>
    %65 = vector.extract_strided_slice %5 {offsets = [0, 384], sizes = [8, 128], strides = [1, 1]} : vector<8x512xf32> to vector<8x128xf32>
    %c2 = arith.constant 2 : index
    %c0_34 = arith.constant 0 : index
    %c0_35 = arith.constant 0 : index
    %66 = vector.load %arg4[%c2, %c0_34, %c0_35] : memref<3x32x128xf32, #tpu.memory_space<vmem>>, vector<1x32x128xf32>
    %67 = vector.shape_cast %66 : vector<1x32x128xf32> to vector<32x128xf32>
    %cst_36 = arith.constant dense<0.000000e+00> : vector<8x128xf32>
    %68 = tpu.matmul %64, %67, %cst_36 {dimension_numbers = #tpu.dot_dimension_numbers<[1], [0], [0], [1], [0, 0, 1, 1], [], []>} : vector<8x32xf32>, vector<32x128xf32>, vector<8x128xf32> -> vector<8x128xf32>
    %c2_37 = arith.constant 2 : index
    %c0_38 = arith.constant 0 : index
    %c0_39 = arith.constant 0 : index
    %69 = vector.load %arg5[%c2_37, %c0_38, %c0_39] : memref<3x1x128xf32, #tpu.memory_space<vmem>>, vector<1x1x128xf32>
    %70 = vector.shape_cast %69 : vector<1x1x128xf32> to vector<1x128xf32>
    %71 = vector.broadcast %70 : vector<1x128xf32> to vector<8x128xf32>
    %72 = arith.addf %68, %71 : vector<8x128xf32>
    %73 = arith.addf %65, %72 : vector<8x128xf32>
    %74 = math.tanh %73 : vector<8x128xf32>
    %75 = vector.extract_strided_slice %74 {offsets = [0, 0], sizes = [8, 32], strides = [1, 1]} : vector<8x128xf32> to vector<8x32xf32>
    %76 = vector.extract_strided_slice %74 {offsets = [0, 32], sizes = [8, 32], strides = [1, 1]} : vector<8x128xf32> to vector<8x32xf32>
    %77 = vector.extract_strided_slice %74 {offsets = [0, 64], sizes = [8, 32], strides = [1, 1]} : vector<8x128xf32> to vector<8x32xf32>
    %78 = vector.extract_strided_slice %73 {offsets = [0, 96], sizes = [8, 32], strides = [1, 1]} : vector<8x128xf32> to vector<8x32xf32>
    %79 = arith.mulf %64, %77 : vector<8x32xf32>
    %c2_40 = arith.constant 2 : index
    %c0_41 = arith.constant 0 : index
    %c0_42 = arith.constant 0 : index
    %80 = vector.load %arg6[%c2_40, %c0_41, %c0_42] : memref<3x32x32xf32, #tpu.memory_space<vmem>>, vector<1x32x32xf32>
    %81 = vector.shape_cast %80 : vector<1x32x32xf32> to vector<32x32xf32>
    %cst_43 = arith.constant dense<0.000000e+00> : vector<8x32xf32>
    %82 = tpu.matmul %79, %81, %cst_43 {dimension_numbers = #tpu.dot_dimension_numbers<[1], [0], [0], [1], [0, 0, 1, 1], [], []>} : vector<8x32xf32>, vector<32x32xf32>, vector<8x32xf32> -> vector<8x32xf32>
    %83 = arith.addf %78, %82 : vector<8x32xf32>
    %c2_44 = arith.constant 2 : index
    %c0_45 = arith.constant 0 : index
    %c0_46 = arith.constant 0 : index
    %84 = vector.load %arg7[%c2_44, %c0_45, %c0_46] : memref<3x1x32xf32, #tpu.memory_space<vmem>>, vector<1x1x32xf32>
    %85 = vector.shape_cast %84 : vector<1x1x32xf32> to vector<1x32xf32>
    %86 = vector.broadcast %85 : vector<1x32xf32> to vector<8x32xf32>
    %87 = arith.addf %83, %86 : vector<8x32xf32>
    %88 = math.tanh %87 : vector<8x32xf32>
    %cst_47 = arith.constant 1.000000e+00 : f32
    %89 = vector.broadcast %cst_47 : f32 to vector<8x32xf32>
    %90 = arith.subf %89, %76 : vector<8x32xf32>
    %91 = arith.mulf %90, %88 : vector<8x32xf32>
    %92 = arith.mulf %75, %64 : vector<8x32xf32>
    %93 = arith.addf %91, %92 : vector<8x32xf32>
    %c0_48 = arith.constant 0 : index
    %c0_49 = arith.constant 0 : index
    %94 = vector.load %arg8[%c0_48, %c0_49] : memref<32x128xf32, #tpu.memory_space<vmem>>, vector<32x128xf32>
    %cst_50 = arith.constant dense<0.000000e+00> : vector<8x128xf32>
    %95 = tpu.matmul %93, %94, %cst_50 {dimension_numbers = #tpu.dot_dimension_numbers<[1], [0], [0], [1], [0, 0, 1, 1], [], []>} : vector<8x32xf32>, vector<32x128xf32>, vector<8x128xf32> -> vector<8x128xf32>
    %c0_51 = arith.constant 0 : index
    %c0_52 = arith.constant 0 : index
    %96 = vector.load %arg9[%c0_51, %c0_52] : memref<1x128xf32, #tpu.memory_space<vmem>>, vector<1x128xf32>
    %97 = vector.broadcast %96 : vector<1x128xf32> to vector<8x128xf32>
    %98 = arith.addf %95, %97 : vector<8x128xf32>
    %c0_53 = arith.constant 0 : index
    %c0_54 = arith.constant 0 : index
    %99 = vector.load %arg10[%c0_53, %c0_54] : memref<8x128xf32, #tpu.memory_space<vmem>>, vector<8x128xf32>
    tpu.vector_store %arg10[%c0_53, %c0_54], %98 {strides = array<i32>} : memref<8x128xf32, #tpu.memory_space<vmem>>, vector<8x128xf32>,
    return
  }
  func.func @transform_0(%arg0: i32) -> (i32, i32) {
    %c0_i32 = arith.constant 0 : i32
    %c0_i32_0 = arith.constant 0 : i32
    return %arg0, %c0_i32 : i32, i32
  }
  func.func @transform_1(%arg0: i32) -> (i32, i32) {
    %c0_i32 = arith.constant 0 : i32
    %c0_i32_0 = arith.constant 0 : i32
    %c0_i32_1 = arith.constant 0 : i32
    return %c0_i32, %c0_i32_0 : i32, i32
  }
  func.func @transform_2(%arg0: i32) -> (i32, i32) {
    %c0_i32 = arith.constant 0 : i32
    %c0_i32_0 = arith.constant 0 : i32
    %c0_i32_1 = arith.constant 0 : i32
    return %c0_i32, %c0_i32_0 : i32, i32
  }
  func.func @transform_3(%arg0: i32) -> (i32, i32, i32) {
    %c0_i32 = arith.constant 0 : i32
    %c0_i32_0 = arith.constant 0 : i32
    %c0_i32_1 = arith.constant 0 : i32
    %c0_i32_2 = arith.constant 0 : i32
    return %c0_i32, %c0_i32_0, %c0_i32_1 : i32, i32, i32
  }
  func.func @transform_4(%arg0: i32) -> (i32, i32, i32) {
    %c0_i32 = arith.constant 0 : i32
    %c0_i32_0 = arith.constant 0 : i32
    %c0_i32_1 = arith.constant 0 : i32
    %c0_i32_2 = arith.constant 0 : i32
    return %c0_i32, %c0_i32_0, %c0_i32_1 : i32, i32, i32
  }
  func.func @transform_5(%arg0: i32) -> (i32, i32, i32) {
    %c0_i32 = arith.constant 0 : i32
    %c0_i32_0 = arith.constant 0 : i32
    %c0_i32_1 = arith.constant 0 : i32
    %c0_i32_2 = arith.constant 0 : i32
    return %c0_i32, %c0_i32_0, %c0_i32_1 : i32, i32, i32
  }
  func.func @transform_6(%arg0: i32) -> (i32, i32, i32) {
    %c0_i32 = arith.constant 0 : i32
    %c0_i32_0 = arith.constant 0 : i32
    %c0_i32_1 = arith.constant 0 : i32
    %c0_i32_2 = arith.constant 0 : i32
    return %c0_i32, %c0_i32_0, %c0_i32_1 : i32, i32, i32
  }
  func.func @transform_7(%arg0: i32) -> (i32, i32) {
    %c0_i32 = arith.constant 0 : i32
    %c0_i32_0 = arith.constant 0 : i32
    %c0_i32_1 = arith.constant 0 : i32
    return %c0_i32, %c0_i32_0 : i32, i32
  }
  func.func @transform_8(%arg0: i32) -> (i32, i32) {
    %c0_i32 = arith.constant 0 : i32
    %c0_i32_0 = arith.constant 0 : i32
    %c0_i32_1 = arith.constant 0 : i32
    return %c0_i32, %c0_i32_0 : i32, i32
  }
  func.func @transform_9(%arg0: i32) -> (i32, i32) {
    %c0_i32 = arith.constant 0 : i32
    %c0_i32_0 = arith.constant 0 : i32
    return %arg0, %c0_i32 : i32, i32
  }
}

</mosaic_0001>

<llo_original>
// kernel: tpu_custom_call.1
$region0: #{tpu_custom_call.1}
  #allocation0 [shape = 'u32[]', space=smem, size = 0x4, offset = 0x4, fixed_abs, tag = 'smem constant byte address 0x4 - core index']
  #allocation1 [shape = 'u32[144,128]{1,0:T(1,128)}', space=vmem, size = 0x12000, scoped, tag = 'internal scratch']
  %s0 = inlined_call_operand.vmem [shape: f32[8,4], index: 0, kind: input, shape index: {}]
  %s1 = inlined_call_operand.hbm [shape: f32[4,512], index: 1, kind: input, shape index: {}]
  %s2 = inlined_call_operand.vmem [shape: f32[1,512], index: 2, kind: input, shape index: {}]
  %s3 = inlined_call_operand.hbm [shape: f32[3,32,128], index: 3, kind: input, shape index: {}]
  %s4 = inlined_call_operand.hbm [shape: f32[3,1,128], index: 4, kind: input, shape index: {}]
  %s5 = inlined_call_operand.hbm [shape: f32[3,32,32], index: 5, kind: input, shape index: {}]
  %s6 = inlined_call_operand.hbm [shape: f32[3,1,32], index: 6, kind: input, shape index: {}]
  %s7 = inlined_call_operand.vmem [shape: f32[32,128], index: 7, kind: input, shape index: {}]
  %s8 = inlined_call_operand.vmem [shape: f32[1,128], index: 8, kind: input, shape index: {}]
  %s9 = inlined_call_operand.hbm [shape: f32[8,128], index: 9, kind: output, shape index: {}]
  %s10 = sld [smem:[#allocation0]]
  $region66: #{tpu_custom_call.1} parent=0
    _
  %s12 = ssub.s32 1, %s10
  %s13 = scalar_select 0, %s12, %s10
  $region1: #{tpu_custom_call.1} parent=0
    #allocation2 [shape = 'u8[8192]{0}', space=vmem, size = 0x2000, scoped, tag = 'input window, operand 1, single buffered']
    #allocation3 [shape = 's32[1]{0}', space=sflag, size = 0x4, scoped, tag = 'scoped memory for tpu_custom_call.1']
    #allocation4 [shape = 's32[1]{0}', space=sflag, size = 0x4, scoped, tag = 'scoped memory for tpu_custom_call.1']
    #allocation5 [shape = 'u8[49152]{0}', space=vmem, size = 0xc000, scoped, tag = 'input window, operand 3, single buffered']
    #allocation6 [shape = 's32[1]{0}', space=sflag, size = 0x4, scoped, tag = 'scoped memory for tpu_custom_call.1']
    #allocation7 [shape = 'u8[1536]{0}', space=vmem, size = 0x800, scoped, tag = 'input window, operand 4, single buffered']
    #allocation8 [shape = 'u8[49152]{0}', space=vmem, size = 0xc000, scoped, tag = 'input window, operand 5, single buffered']
    #allocation9 [shape = 's32[1]{0}', space=sflag, size = 0x4, scoped, tag = 'scoped memory for tpu_custom_call.1']
    #allocation10 [shape = 'u8[1536]{0}', space=vmem, size = 0x800, scoped, tag = 'input window, operand 6, single buffered']
    #allocation11 [shape = 'u8[4096]{0}', space=vmem, size = 0x1000, scoped, tag = 'output window, operand 0, single buffered']
    %14 = vsyncpa [#allocation3], 0
    %15 = vsyncpa [#allocation6], 0
    %16 = vsyncpa [#allocation9], 0
    %17 = vsyncpa [#allocation4], 0
    // Predicated region
    $region2: #{tpu_custom_call.1} parent=1 // pred_check
      _
    $region3: #{tpu_custom_call.1} parent=1 // pred_check_branch
      %19 = sbr.rel (0) target = $region5
    $region4: #{tpu_custom_call.1} parent=1 // pred_region
      _
    $region5: #{tpu_custom_call.1} parent=1 // pred_fallthru
      _
    // Predicated region
    $region6: #{tpu_custom_call.1} parent=1 // pred_check
      _
    $region7: #{tpu_custom_call.1} parent=1 // pred_check_branch
      %21 = sbr.rel (0) target = $region9
    $region8: #{tpu_custom_call.1} parent=1 // pred_region
      %s23 = ssub.s32 256, 256
      %24 = vsyncadd [#allocation3], %s23
      %s26 = sshll.u32 [#allocation2], 4
      %s27 = int_to_ptr.vmem [resolvable:$true] %s26
      %29 = dma.hbm_to_vmem [thread:$0]  %s1, 256, %s27, [#allocation3]
    $region9: #{tpu_custom_call.1} parent=1 // pred_fallthru
      _
    // Predicated region
    $region10: #{tpu_custom_call.1} parent=1 // pred_check
      _
    $region11: #{tpu_custom_call.1} parent=1 // pred_check_branch
      %31 = sbr.rel (0) target = $region13
    $region12: #{tpu_custom_call.1} parent=1 // pred_region
      _
    $region13: #{tpu_custom_call.1} parent=1 // pred_fallthru
      _
    // Predicated region
    $region14: #{tpu_custom_call.1} parent=1 // pred_check
      _
    $region15: #{tpu_custom_call.1} parent=1 // pred_check_branch
      %33 = sbr.rel (0) target = $region17
    $region16: #{tpu_custom_call.1} parent=1 // pred_region
      %s35 = ssub.s32 1536, 1536
      %36 = vsyncadd [#allocation6], %s35
      %s37 = sshll.u32 [#allocation5], 4
      %s38 = int_to_ptr.vmem [resolvable:$true] %s37
      %43 = dma.hbm_to_vmem [thread:$0]  %s3, 1536, %s38, [#allocation6], 128, 128, 8
    $region17: #{tpu_custom_call.1} parent=1 // pred_fallthru
      _
    // Predicated region
    $region18: #{tpu_custom_call.1} parent=1 // pred_check
      _
    $region19: #{tpu_custom_call.1} parent=1 // pred_check_branch
      %45 = sbr.rel (0) target = $region21
    $region20: #{tpu_custom_call.1} parent=1 // pred_region
      %s47 = ssub.s32 48, 48
      %48 = vsyncadd [#allocation6], %s47
      %s49 = sshll.u32 [#allocation7], 4
      %s50 = int_to_ptr.vmem [resolvable:$true] %s49
      %55 = dma.hbm_to_vmem [thread:$0]  %s4, 48, %s50, [#allocation6], 16, 16, 1
    $region21: #{tpu_custom_call.1} parent=1 // pred_fallthru
      _
    // Predicated region
    $region22: #{tpu_custom_call.1} parent=1 // pred_check
      _
    $region23: #{tpu_custom_call.1} parent=1 // pred_check_branch
      %57 = sbr.rel (0) target = $region25
    $region24: #{tpu_custom_call.1} parent=1 // pred_region
      %s59 = ssub.s32 1536, 1536
      %60 = vsyncadd [#allocation9], %s59
      %s61 = sshll.u32 [#allocation8], 4
      %s62 = int_to_ptr.vmem [resolvable:$true] %s61
      %67 = dma.hbm_to_vmem [thread:$0]  %s5, 1536, %s62, [#allocation9], 128, 128, 8
    $region25: #{tpu_custom_call.1} parent=1 // pred_fallthru
      _
    // Predicated region
    $region26: #{tpu_custom_call.1} parent=1 // pred_check
      _
    $region27: #{tpu_custom_call.1} parent=1 // pred_check_branch
      %69 = sbr.rel (0) target = $region29
    $region28: #{tpu_custom_call.1} parent=1 // pred_region
      %s71 = ssub.s32 48, 48
      %72 = vsyncadd [#allocation9], %s71
      %s73 = sshll.u32 [#allocation10], 4
      %s74 = int_to_ptr.vmem [resolvable:$true] %s73
      %79 = dma.hbm_to_vmem [thread:$0]  %s6, 48, %s74, [#allocation9], 16, 16, 1
    $region29: #{tpu_custom_call.1} parent=1 // pred_fallthru
      _
    // Predicated region
    $region30: #{tpu_custom_call.1} parent=1 // pred_check
      _
    $region31: #{tpu_custom_call.1} parent=1 // pred_check_branch
      %81 = sbr.rel (0) target = $region33
    $region32: #{tpu_custom_call.1} parent=1 // pred_region
      _
    $region33: #{tpu_custom_call.1} parent=1 // pred_fallthru
      _
    // Predicated region
    $region34: #{tpu_custom_call.1} parent=1 // pred_check
      _
    $region35: #{tpu_custom_call.1} parent=1 // pred_check_branch
      %83 = sbr.rel (0) target = $region37
    $region36: #{tpu_custom_call.1} parent=1 // pred_region
      _
    $region37: #{tpu_custom_call.1} parent=1 // pred_fallthru
      _
    // Predicated region
    $region38: #{tpu_custom_call.1} parent=1 // pred_check
      _
    $region39: #{tpu_custom_call.1} parent=1 // pred_check_branch
      %85 = sbr.rel (0) target = $region41
    $region40: #{tpu_custom_call.1} parent=1 // pred_region
      %86 = dma.done [#allocation3], 256
    $region41: #{tpu_custom_call.1} parent=1 // pred_fallthru
      _
    // Predicated region
    $region42: #{tpu_custom_call.1} parent=1 // pred_check
      _
    $region43: #{tpu_custom_call.1} parent=1 // pred_check_branch
      %88 = sbr.rel (0) target = $region45
    $region44: #{tpu_custom_call.1} parent=1 // pred_region
      %89 = dma.done [#allocation6], 1536
    $region45: #{tpu_custom_call.1} parent=1 // pred_fallthru
      _
    // Predicated region
    $region46: #{tpu_custom_call.1} parent=1 // pred_check
      _
    $region47: #{tpu_custom_call.1} parent=1 // pred_check_branch
      %91 = sbr.rel (0) target = $region49
    $region48: #{tpu_custom_call.1} parent=1 // pred_region
      %92 = dma.done [#allocation6], 48
    $region49: #{tpu_custom_call.1} parent=1 // pred_fallthru
      _
    // Predicated region
    $region50: #{tpu_custom_call.1} parent=1 // pred_check
      _
    $region51: #{tpu_custom_call.1} parent=1 // pred_check_branch
      %94 = sbr.rel (0) target = $region53
    $region52: #{tpu_custom_call.1} parent=1 // pred_region
      %95 = dma.done [#allocation9], 1536
    $region53: #{tpu_custom_call.1} parent=1 // pred_fallthru
      _
    // Predicated region
    $region54: #{tpu_custom_call.1} parent=1 // pred_check
      _
    $region55: #{tpu_custom_call.1} parent=1 // pred_check_branch
      %97 = sbr.rel (0) target = $region57
    $region56: #{tpu_custom_call.1} parent=1 // pred_region
      %98 = dma.done [#allocation9], 48
    $region57: #{tpu_custom_call.1} parent=1 // pred_fallthru
      _
    %v99 = vld [vmem:[%s0] sm:$0xff]
    %v100 = vld [vmem:[#allocation2] sm:$0xff]
    %v101 = vld [vmem:[#allocation2 + $0x8] sm:$0xff]
    %v102 = vld [vmem:[%s2] sm:$0xf]
    %v104 = vlaneseq
    %v105 = vshrl.u32 %v104, 7
    %v106 = vsub.s32 0, %v105
    %v107 = vrot.slane %v102, %v106
    %v108 = vlaneseq
    %v109 = vshrl.u32 %v108, 7
    %v110 = vsub.s32 1, %v109
    %v111 = vrot.slane %v102, %v110
    %v112 = vlaneseq
    %v113 = vshrl.u32 %v112, 7
    %v114 = vsub.s32 2, %v113
    %v115 = vrot.slane %v102, %v114
    %v116 = vlaneseq
    %v117 = vshrl.u32 %v116, 7
    %v118 = vsub.s32 3, %v117
    %v119 = vrot.slane %v102, %v118
    %v126 = vcombine.high %v100, %v100
    %v127 = vcombine.high %v101, %v101
    %vm128 = vcmask 31744
    %v130 = vsel %vm128, %v99, 0
    %vm132 = vcmask 1043456
    %v133 = vsel %vm132, %v100, 0
    %v135 = vsel %vm132, %v126, 0
    %v137 = vsel %vm132, %v101, 0
    %v139 = vsel %vm132, %v127, 0
    %141 = vmatprep.subr.mxu0 %v135
    %142 = vmatpush1.msra.mxu0 %v133
    %143 = vmatprep.subr.mxu0 0.0
    %144 = vmatpush1.msra.mxu0 0.0
    %145 = vmatprep.subr.mxu0 0.0
    %146 = vmatpush1.msra.mxu0 0.0
    %147 = vmatprep.subr.mxu0 0.0
    %148 = vmatpush1.msra.mxu0 0.0
    %149 = vmatprep.subr.mxu0 0.0
    %150 = vmatpush1.msra.mxu0 0.0
    %151 = vmatprep.subr.mxu0 0.0
    %152 = vmatpush1.msra.mxu0 0.0
    %153 = vmatprep.subr.mxu0 0.0
    %154 = vmatpush1.msra.mxu0 0.0
    %155 = vmatprep.subr.mxu0 0.0
    %156 = vmatpush1.msra.mxu0 0.0
    %157 = vmatprep.subr.mxu0 0.0
    %158 = vmatpush1.msra.mxu0 0.0
    %159 = vmatprep.subr.mxu0 0.0
    %160 = vmatpush1.msra.mxu0 0.0
    %161 = vmatprep.subr.mxu0 0.0
    %162 = vmatpush1.msra.mxu0 0.0
    %163 = vmatprep.subr.mxu0 0.0
    %164 = vmatpush1.msra.mxu0 0.0
    %165 = vmatprep.subr.mxu0 0.0
    %166 = vmatpush1.msra.mxu0 0.0
    %167 = vmatprep.subr.mxu0 0.0
    %168 = vmatpush1.msra.mxu0 0.0
    %169 = vmatprep.subr.mxu0 0.0
    %170 = vmatpush1.msra.mxu0 0.0
    %171 = vmatprep.subr.mxu0 0.0
    %172 = vmatpush1.msra.mxu0 0.0
    %173 = vmatprep.subr.mxu0 0.0
    %174 = vmatpush1.msra.mxu0 0.0
    %175 = vmatprep.subr.mxu0 0.0
    %176 = vmatpush1.msra.mxu0 0.0
    %177 = vmatprep.subr.mxu0 0.0
    %178 = vmatpush1.msra.mxu0 0.0
    %179 = vmatprep.subr.mxu0 0.0
    %180 = vmatpush1.msra.mxu0 0.0
    %181 = vmatprep.subr.mxu0 0.0
    %182 = vmatpush1.msra.mxu0 0.0
    %183 = vmatprep.subr.mxu0 0.0
    %184 = vmatpush1.msra.mxu0 0.0
    %185 = vmatprep.subr.mxu0 0.0
    %186 = vmatpush1.msra.mxu0 0.0
    %187 = vmatprep.subr.mxu0 0.0
    %188 = vmatpush1.msra.mxu0 0.0
    %189 = vmatprep.subr.mxu0 0.0
    %190 = vmatpush1.msra.mxu0 0.0
    %191 = vmatprep.subr.mxu0 0.0
    %192 = vmatpush1.msra.mxu0 0.0
    %193 = vmatprep.subr.mxu0 0.0
    %194 = vmatpush1.msra.mxu0 0.0
    %195 = vmatprep.subr.mxu0 0.0
    %196 = vmatpush1.msra.mxu0 0.0
    %197 = vmatprep.subr.mxu0 0.0
    %198 = vmatpush1.msra.mxu0 0.0
    %199 = vmatprep.subr.mxu0 0.0
    %200 = vmatpush1.msra.mxu0 0.0
    %201 = vmatprep.subr.mxu0 0.0
    %202 = vmatpush1.msra.mxu0 0.0
    %203 = vmatprep.subr.mxu0 0.0
    %204 = vmatpush1.msra.mxu0 0.0
    %205 = vmatprep.mubr.f32.mxu0 0.0
    %206 = vmatmul.mubr.f32.gmra.mrb[0].mxu0 %v130
    %v207 = vpop.f32.mrb[0].mxu0
    %v208 = vadd.f32 %v107, %v207
    %v209 = vpop.f32.mrb[0].mxu0
    %v210 = vadd.f32 %v111, %v209
    %211 = vdwg.mxu0
    %212 = vmatprep.subr.mxu0 %v139
    %213 = vmatpush1.msra.mxu0 %v137
    %214 = vmatprep.subr.mxu0 0.0
    %215 = vmatpush1.msra.mxu0 0.0
    %216 = vmatprep.subr.mxu0 0.0
    %217 = vmatpush1.msra.mxu0 0.0
    %218 = vmatprep.subr.mxu0 0.0
    %219 = vmatpush1.msra.mxu0 0.0
    %220 = vmatprep.subr.mxu0 0.0
    %221 = vmatpush1.msra.mxu0 0.0
    %222 = vmatprep.subr.mxu0 0.0
    %223 = vmatpush1.msra.mxu0 0.0
    %224 = vmatprep.subr.mxu0 0.0
    %225 = vmatpush1.msra.mxu0 0.0
    %226 = vmatprep.subr.mxu0 0.0
    %227 = vmatpush1.msra.mxu0 0.0
    %228 = vmatprep.subr.mxu0 0.0
    %229 = vmatpush1.msra.mxu0 0.0
    %230 = vmatprep.subr.mxu0 0.0
    %231 = vmatpush1.msra.mxu0 0.0
    %232 = vmatprep.subr.mxu0 0.0
    %233 = vmatpush1.msra.mxu0 0.0
    %234 = vmatprep.subr.mxu0 0.0
    %235 = vmatpush1.msra.mxu0 0.0
    %236 = vmatprep.subr.mxu0 0.0
    %237 = vmatpush1.msra.mxu0 0.0
    %238 = vmatprep.subr.mxu0 0.0
    %239 = vmatpush1.msra.mxu0 0.0
    %240 = vmatprep.subr.mxu0 0.0
    %241 = vmatpush1.msra.mxu0 0.0
    %242 = vmatprep.subr.mxu0 0.0
    %243 = vmatpush1.msra.mxu0 0.0
    %244 = vmatprep.subr.mxu0 0.0
    %245 = vmatpush1.msra.mxu0 0.0
    %246 = vmatprep.subr.mxu0 0.0
    %247 = vmatpush1.msra.mxu0 0.0
    %248 = vmatprep.subr.mxu0 0.0
    %249 = vmatpush1.msra.mxu0 0.0
    %250 = vmatprep.subr.mxu0 0.0
    %251 = vmatpush1.msra.mxu0 0.0
    %252 = vmatprep.subr.mxu0 0.0
    %253 = vmatpush1.msra.mxu0 0.0
    %254 = vmatprep.subr.mxu0 0.0
    %255 = vmatpush1.msra.mxu0 0.0
    %256 = vmatprep.subr.mxu0 0.0
    %257 = vmatpush1.msra.mxu0 0.0
    %258 = vmatprep.subr.mxu0 0.0
    %259 = vmatpush1.msra.mxu0 0.0
    %260 = vmatprep.subr.mxu0 0.0
    %261 = vmatpush1.msra.mxu0 0.0
    %262 = vmatprep.subr.mxu0 0.0
    %263 = vmatpush1.msra.mxu0 0.0
    %264 = vmatprep.subr.mxu0 0.0
    %265 = vmatpush1.msra.mxu0 0.0
    %266 = vmatprep.subr.mxu0 0.0
    %267 = vmatpush1.msra.mxu0 0.0
    %268 = vmatprep.subr.mxu0 0.0
    %269 = vmatpush1.msra.mxu0 0.0
    %270 = vmatprep.subr.mxu0 0.0
    %271 = vmatpush1.msra.mxu0 0.0
    %272 = vmatprep.subr.mxu0 0.0
    %273 = vmatpush1.msra.mxu0 0.0
    %274 = vmatprep.subr.mxu0 0.0
    %275 = vmatpush1.msra.mxu0 0.0
    %276 = vmatprep.mubr.f32.mxu0 0.0
    %277 = vmatmul.mubr.f32.gmra.mrb[0].mxu0 %v130
    %v278 = vpop.f32.mrb[0].mxu0
    %v279 = vadd.f32 %v115, %v278
    %v280 = vpop.f32.mrb[0].mxu0
    %v281 = vadd.f32 %v119, %v280
    %282 = vdwg.mxu0
    %v283 = vld [vmem:[#allocation5] sm:$0xff]
    %v284 = vld [vmem:[#allocation5 + $0x8] sm:$0xff]
    %v285 = vld [vmem:[#allocation5 + $0x10] sm:$0xff]
    %v286 = vld [vmem:[#allocation5 + $0x18] sm:$0xff]
    %v287 = vld [vmem:[#allocation7] sm:$0x1]
    %v289 = vlaneseq
    %v290 = vshrl.u32 %v289, 7
    %v291 = vsub.s32 0, %v290
    %v292 = vrot.slane %v287, %v291
    %vm294 = vcmask 261120
    %v296 = vsel %vm294, %v208, 0
    %298 = vmatprep.subr.mxu0 0.0
    %299 = vmatpush1.msra.mxu0 %v283
    %300 = vmatprep.subr.mxu0 0.0
    %301 = vmatpush1.msra.mxu0 %v284
    %302 = vmatprep.subr.mxu0 0.0
    %303 = vmatpush1.msra.mxu0 %v285
    %304 = vmatprep.subr.mxu0 0.0
    %305 = vmatpush1.msra.mxu0 %v286
    %306 = vmatprep.subr.mxu0 0.0
    %307 = vmatpush1.msra.mxu0 0.0
    %308 = vmatprep.subr.mxu0 0.0
    %309 = vmatpush1.msra.mxu0 0.0
    %310 = vmatprep.subr.mxu0 0.0
    %311 = vmatpush1.msra.mxu0 0.0
    %312 = vmatprep.subr.mxu0 0.0
    %313 = vmatpush1.msra.mxu0 0.0
    %314 = vmatprep.subr.mxu0 0.0
    %315 = vmatpush1.msra.mxu0 0.0
    %316 = vmatprep.subr.mxu0 0.0
    %317 = vmatpush1.msra.mxu0 0.0
    %318 = vmatprep.subr.mxu0 0.0
    %319 = vmatpush1.msra.mxu0 0.0
    %320 = vmatprep.subr.mxu0 0.0
    %321 = vmatpush1.msra.mxu0 0.0
    %322 = vmatprep.subr.mxu0 0.0
    %323 = vmatpush1.msra.mxu0 0.0
    %324 = vmatprep.subr.mxu0 0.0
    %325 = vmatpush1.msra.mxu0 0.0
    %326 = vmatprep.subr.mxu0 0.0
    %327 = vmatpush1.msra.mxu0 0.0
    %328 = vmatprep.subr.mxu0 0.0
    %329 = vmatpush1.msra.mxu0 0.0
    %330 = vmatprep.subr.mxu0 0.0
    %331 = vmatpush1.msra.mxu0 0.0
    %332 = vmatprep.subr.mxu0 0.0
    %333 = vmatpush1.msra.mxu0 0.0
    %334 = vmatprep.subr.mxu0 0.0
    %335 = vmatpush1.msra.mxu0 0.0
    %336 = vmatprep.subr.mxu0 0.0
    %337 = vmatpush1.msra.mxu0 0.0
    %338 = vmatprep.subr.mxu0 0.0
    %339 = vmatpush1.msra.mxu0 0.0
    %340 = vmatprep.subr.mxu0 0.0
    %341 = vmatpush1.msra.mxu0 0.0
    %342 = vmatprep.subr.mxu0 0.0
    %343 = vmatpush1.msra.mxu0 0.0
    %344 = vmatprep.subr.mxu0 0.0
    %345 = vmatpush1.msra.mxu0 0.0
    %346 = vmatprep.subr.mxu0 0.0
    %347 = vmatpush1.msra.mxu0 0.0
    %348 = vmatprep.subr.mxu0 0.0
    %349 = vmatpush1.msra.mxu0 0.0
    %350 = vmatprep.subr.mxu0 0.0
    %351 = vmatpush1.msra.mxu0 0.0
    %352 = vmatprep.subr.mxu0 0.0
    %353 = vmatpush1.msra.mxu0 0.0
    %354 = vmatprep.subr.mxu0 0.0
    %355 = vmatpush1.msra.mxu0 0.0
    %356 = vmatprep.subr.mxu0 0.0
    %357 = vmatpush1.msra.mxu0 0.0
    %358 = vmatprep.subr.mxu0 0.0
    %359 = vmatpush1.msra.mxu0 0.0
    %360 = vmatprep.subr.mxu0 0.0
    %361 = vmatpush1.msra.mxu0 0.0
    %362 = vmatprep.mubr.f32.mxu0 0.0
    %363 = vmatmul.mubr.f32.gmra.mrb[0].mxu0 %v296
    %v364 = vpop.f32.mrb[0].mxu0
    %v365 = vadd.f32 %v292, %v364
    %v366 = vpop.f32.mrb[0].mxu0
    %367 = vdwg.mxu0
    %v368 = vadd.f32 %v210, %v365
    %v369 = vtanh.pop %v368
    %371 = vrot.lane.b32.xlu0 %v369, 64
    %v372 = vpop.permute.xlu0 %371
    %v374 = vmul.f32 %v208, %v372
    %v375 = vld [vmem:[#allocation8] sm:$0xff]
    %v376 = vld [vmem:[#allocation8 + $0x8] sm:$0xff]
    %v377 = vld [vmem:[#allocation8 + $0x10] sm:$0xff]
    %v378 = vld [vmem:[#allocation8 + $0x18] sm:$0xff]
    %v380 = vsel %vm294, %v374, 0
    %382 = vmatprep.subr.mxu0 0.0
    %383 = vmatpush1.msra.mxu0 %v375
    %384 = vmatprep.subr.mxu0 0.0
    %385 = vmatpush1.msra.mxu0 %v376
    %386 = vmatprep.subr.mxu0 0.0
    %387 = vmatpush1.msra.mxu0 %v377
    %388 = vmatprep.subr.mxu0 0.0
    %389 = vmatpush1.msra.mxu0 %v378
    %390 = vmatprep.subr.mxu0 0.0
    %391 = vmatpush1.msra.mxu0 0.0
    %392 = vmatprep.subr.mxu0 0.0
    %393 = vmatpush1.msra.mxu0 0.0
    %394 = vmatprep.subr.mxu0 0.0
    %395 = vmatpush1.msra.mxu0 0.0
    %396 = vmatprep.subr.mxu0 0.0
    %397 = vmatpush1.msra.mxu0 0.0
    %398 = vmatprep.subr.mxu0 0.0
    %399 = vmatpush1.msra.mxu0 0.0
    %400 = vmatprep.subr.mxu0 0.0
    %401 = vmatpush1.msra.mxu0 0.0
    %402 = vmatprep.subr.mxu0 0.0
    %403 = vmatpush1.msra.mxu0 0.0
    %404 = vmatprep.subr.mxu0 0.0
    %405 = vmatpush1.msra.mxu0 0.0
    %406 = vmatprep.subr.mxu0 0.0
    %407 = vmatpush1.msra.mxu0 0.0
    %408 = vmatprep.subr.mxu0 0.0
    %409 = vmatpush1.msra.mxu0 0.0
    %410 = vmatprep.subr.mxu0 0.0
    %411 = vmatpush1.msra.mxu0 0.0
    %412 = vmatprep.subr.mxu0 0.0
    %413 = vmatpush1.msra.mxu0 0.0
    %414 = vmatprep.subr.mxu0 0.0
    %415 = vmatpush1.msra.mxu0 0.0
    %416 = vmatprep.subr.mxu0 0.0
    %417 = vmatpush1.msra.mxu0 0.0
    %418 = vmatprep.subr.mxu0 0.0
    %419 = vmatpush1.msra.mxu0 0.0
    %420 = vmatprep.subr.mxu0 0.0
    %421 = vmatpush1.msra.mxu0 0.0
    %422 = vmatprep.subr.mxu0 0.0
    %423 = vmatpush1.msra.mxu0 0.0
    %424 = vmatprep.subr.mxu0 0.0
    %425 = vmatpush1.msra.mxu0 0.0
    %426 = vmatprep.subr.mxu0 0.0
    %427 = vmatpush1.msra.mxu0 0.0
    %428 = vmatprep.subr.mxu0 0.0
    %429 = vmatpush1.msra.mxu0 0.0
    %430 = vmatprep.subr.mxu0 0.0
    %431 = vmatpush1.msra.mxu0 0.0
    %432 = vmatprep.subr.mxu0 0.0
    %433 = vmatpush1.msra.mxu0 0.0
    %434 = vmatprep.subr.mxu0 0.0
    %435 = vmatpush1.msra.mxu0 0.0
    %436 = vmatprep.subr.mxu0 0.0
    %437 = vmatpush1.msra.mxu0 0.0
    %438 = vmatprep.subr.mxu0 0.0
    %439 = vmatpush1.msra.mxu0 0.0
    %440 = vmatprep.subr.mxu0 0.0
    %441 = vmatpush1.msra.mxu0 0.0
    %442 = vmatprep.subr.mxu0 0.0
    %443 = vmatpush1.msra.mxu0 0.0
    %444 = vmatprep.subr.mxu0 0.0
    %445 = vmatpush1.msra.mxu0 0.0
    %446 = vmatprep.mubr.f32.mxu0 0.0
    %447 = vmatmul.mubr.f32.gmra.mrb[0].mxu0 %v380
    %v448 = vpop.f32.mrb[0].mxu0
    %v449 = vadd.f32 0.0, %v448
    %v450 = vpop.f32.mrb[0].mxu0
    %451 = vdwg.mxu0
    %453 = vrot.lane.b32.xlu0 %v449, 96
    %v454 = vpop.permute.xlu0 %453
    %v456 = vadd.f32 %v368, %v454
    %v457 = vld [vmem:[#allocation10] sm:$0x1]
    %v459 = vlaneseq
    %v460 = vshrl.u32 %v459, 7
    %v461 = vsub.s32 0, %v460
    %v462 = vrot.slane %v457, %v461
    %463 = vrot.lane.b32.xlu0 %v462, 96
    %v464 = vpop.permute.xlu0 %463
    %v466 = vadd.f32 %v456, %v464
    %v467 = vtanh.pop %v466
    %v468 = vsub.f32 1.0, %v369
    %470 = vrot.lane.b32.xlu0 %v467, 64
    %v471 = vpop.permute.xlu0 %470
    %v473 = vmul.f32 %v468, %v471
    %v474 = vmul.f32 %v369, %v208
    %476 = vrot.lane.b32.xlu0 %v474, 32
    %v477 = vpop.permute.xlu0 %476
    %v479 = vadd.f32 %v473, %v477
    %s480 = scalar_lea.vmem [#allocation5], 32
    %v481 = vld [vmem:[%s480] sm:$0xff]
    %v482 = vld [vmem:[%s480 + $0x8] sm:$0xff]
    %v483 = vld [vmem:[%s480 + $0x10] sm:$0xff]
    %v484 = vld [vmem:[%s480 + $0x18] sm:$0xff]
    %s485 = scalar_lea.vmem [#allocation7], 1
    %v486 = vld [vmem:[%s485] sm:$0x1]
    %v488 = vlaneseq
    %v489 = vshrl.u32 %v488, 7
    %v490 = vsub.s32 0, %v489
    %v491 = vrot.slane %v486, %v490
    %494 = vrot.lane.b32.xlu0 %v479, 96
    %v495 = vpop.permute.xlu0 %494
    %v496 = vsel %vm294, %v495, 0
    %498 = vmatprep.subr.mxu0 0.0
    %499 = vmatpush1.msra.mxu0 %v481
    %500 = vmatprep.subr.mxu0 0.0
    %501 = vmatpush1.msra.mxu0 %v482
    %502 = vmatprep.subr.mxu0 0.0
    %503 = vmatpush1.msra.mxu0 %v483
    %504 = vmatprep.subr.mxu0 0.0
    %505 = vmatpush1.msra.mxu0 %v484
    %506 = vmatprep.subr.mxu0 0.0
    %507 = vmatpush1.msra.mxu0 0.0
    %508 = vmatprep.subr.mxu0 0.0
    %509 = vmatpush1.msra.mxu0 0.0
    %510 = vmatprep.subr.mxu0 0.0
    %511 = vmatpush1.msra.mxu0 0.0
    %512 = vmatprep.subr.mxu0 0.0
    %513 = vmatpush1.msra.mxu0 0.0
    %514 = vmatprep.subr.mxu0 0.0
    %515 = vmatpush1.msra.mxu0 0.0
    %516 = vmatprep.subr.mxu0 0.0
    %517 = vmatpush1.msra.mxu0 0.0
    %518 = vmatprep.subr.mxu0 0.0
    %519 = vmatpush1.msra.mxu0 0.0
    %520 = vmatprep.subr.mxu0 0.0
    %521 = vmatpush1.msra.mxu0 0.0
    %522 = vmatprep.subr.mxu0 0.0
    %523 = vmatpush1.msra.mxu0 0.0
    %524 = vmatprep.subr.mxu0 0.0
    %525 = vmatpush1.msra.mxu0 0.0
    %526 = vmatprep.subr.mxu0 0.0
    %527 = vmatpush1.msra.mxu0 0.0
    %528 = vmatprep.subr.mxu0 0.0
    %529 = vmatpush1.msra.mxu0 0.0
    %530 = vmatprep.subr.mxu0 0.0
    %531 = vmatpush1.msra.mxu0 0.0
    %532 = vmatprep.subr.mxu0 0.0
    %533 = vmatpush1.msra.mxu0 0.0
    %534 = vmatprep.subr.mxu0 0.0
    %535 = vmatpush1.msra.mxu0 0.0
    %536 = vmatprep.subr.mxu0 0.0
    %537 = vmatpush1.msra.mxu0 0.0
    %538 = vmatprep.subr.mxu0 0.0
    %539 = vmatpush1.msra.mxu0 0.0
    %540 = vmatprep.subr.mxu0 0.0
    %541 = vmatpush1.msra.mxu0 0.0
    %542 = vmatprep.subr.mxu0 0.0
    %543 = vmatpush1.msra.mxu0 0.0
    %544 = vmatprep.subr.mxu0 0.0
    %545 = vmatpush1.msra.mxu0 0.0
    %546 = vmatprep.subr.mxu0 0.0
    %547 = vmatpush1.msra.mxu0 0.0
    %548 = vmatprep.subr.mxu0 0.0
    %549 = vmatpush1.msra.mxu0 0.0
    %550 = vmatprep.subr.mxu0 0.0
    %551 = vmatpush1.msra.mxu0 0.0
    %552 = vmatprep.subr.mxu0 0.0
    %553 = vmatpush1.msra.mxu0 0.0
    %554 = vmatprep.subr.mxu0 0.0
    %555 = vmatpush1.msra.mxu0 0.0
    %556 = vmatprep.subr.mxu0 0.0
    %557 = vmatpush1.msra.mxu0 0.0
    %558 = vmatprep.subr.mxu0 0.0
    %559 = vmatpush1.msra.mxu0 0.0
    %560 = vmatprep.subr.mxu0 0.0
    %561 = vmatpush1.msra.mxu0 0.0
    %562 = vmatprep.mubr.f32.mxu0 0.0
    %563 = vmatmul.mubr.f32.gmra.mrb[0].mxu0 %v496
    %v564 = vpop.f32.mrb[0].mxu0
    %v565 = vadd.f32 %v491, %v564
    %v566 = vpop.f32.mrb[0].mxu0
    %567 = vdwg.mxu0
    %v568 = vadd.f32 %v279, %v565
    %v569 = vtanh.pop %v568
    %571 = vrot.lane.b32.xlu0 %v569, 96
    %v572 = vpop.permute.xlu0 %571
    %v574 = vmul.f32 %v479, %v572
    %s575 = scalar_lea.vmem [#allocation8], 32
    %v576 = vld [vmem:[%s575] sm:$0xff]
    %v577 = vld [vmem:[%s575 + $0x8] sm:$0xff]
    %v578 = vld [vmem:[%s575 + $0x10] sm:$0xff]
    %v579 = vld [vmem:[%s575 + $0x18] sm:$0xff]
    %581 = vrot.lane.b32.xlu0 %v574, 96
    %v582 = vpop.permute.xlu0 %581
    %v583 = vsel %vm294, %v582, 0
    %585 = vmatprep.subr.mxu0 0.0
    %586 = vmatpush1.msra.mxu0 %v576
    %587 = vmatprep.subr.mxu0 0.0
    %588 = vmatpush1.msra.mxu0 %v577
    %589 = vmatprep.subr.mxu0 0.0
    %590 = vmatpush1.msra.mxu0 %v578
    %591 = vmatprep.subr.mxu0 0.0
    %592 = vmatpush1.msra.mxu0 %v579
    %593 = vmatprep.subr.mxu0 0.0
    %594 = vmatpush1.msra.mxu0 0.0
    %595 = vmatprep.subr.mxu0 0.0
    %596 = vmatpush1.msra.mxu0 0.0
    %597 = vmatprep.subr.mxu0 0.0
    %598 = vmatpush1.msra.mxu0 0.0
    %599 = vmatprep.subr.mxu0 0.0
    %600 = vmatpush1.msra.mxu0 0.0
    %601 = vmatprep.subr.mxu0 0.0
    %602 = vmatpush1.msra.mxu0 0.0
    %603 = vmatprep.subr.mxu0 0.0
    %604 = vmatpush1.msra.mxu0 0.0
    %605 = vmatprep.subr.mxu0 0.0
    %606 = vmatpush1.msra.mxu0 0.0
    %607 = vmatprep.subr.mxu0 0.0
    %608 = vmatpush1.msra.mxu0 0.0
    %609 = vmatprep.subr.mxu0 0.0
    %610 = vmatpush1.msra.mxu0 0.0
    %611 = vmatprep.subr.mxu0 0.0
    %612 = vmatpush1.msra.mxu0 0.0
    %613 = vmatprep.subr.mxu0 0.0
    %614 = vmatpush1.msra.mxu0 0.0
    %615 = vmatprep.subr.mxu0 0.0
    %616 = vmatpush1.msra.mxu0 0.0
    %617 = vmatprep.subr.mxu0 0.0
    %618 = vmatpush1.msra.mxu0 0.0
    %619 = vmatprep.subr.mxu0 0.0
    %620 = vmatpush1.msra.mxu0 0.0
    %621 = vmatprep.subr.mxu0 0.0
    %622 = vmatpush1.msra.mxu0 0.0
    %623 = vmatprep.subr.mxu0 0.0
    %624 = vmatpush1.msra.mxu0 0.0
    %625 = vmatprep.subr.mxu0 0.0
    %626 = vmatpush1.msra.mxu0 0.0
    %627 = vmatprep.subr.mxu0 0.0
    %628 = vmatpush1.msra.mxu0 0.0
    %629 = vmatprep.subr.mxu0 0.0
    %630 = vmatpush1.msra.mxu0 0.0
    %631 = vmatprep.subr.mxu0 0.0
    %632 = vmatpush1.msra.mxu0 0.0
    %633 = vmatprep.subr.mxu0 0.0
    %634 = vmatpush1.msra.mxu0 0.0
    %635 = vmatprep.subr.mxu0 0.0
    %636 = vmatpush1.msra.mxu0 0.0
    %637 = vmatprep.subr.mxu0 0.0
    %638 = vmatpush1.msra.mxu0 0.0
    %639 = vmatprep.subr.mxu0 0.0
    %640 = vmatpush1.msra.mxu0 0.0
    %641 = vmatprep.subr.mxu0 0.0
    %642 = vmatpush1.msra.mxu0 0.0
    %643 = vmatprep.subr.mxu0 0.0
    %644 = vmatpush1.msra.mxu0 0.0
    %645 = vmatprep.subr.mxu0 0.0
    %646 = vmatpush1.msra.mxu0 0.0
    %647 = vmatprep.subr.mxu0 0.0
    %648 = vmatpush1.msra.mxu0 0.0
    %649 = vmatprep.mubr.f32.mxu0 0.0
    %650 = vmatmul.mubr.f32.gmra.mrb[0].mxu0 %v583
    %v651 = vpop.f32.mrb[0].mxu0
    %v652 = vadd.f32 0.0, %v651
    %v653 = vpop.f32.mrb[0].mxu0
    %654 = vdwg.mxu0
    %656 = vrot.lane.b32.xlu0 %v652, 96
    %v657 = vpop.permute.xlu0 %656
    %v659 = vadd.f32 %v568, %v657
    %s660 = scalar_lea.vmem [#allocation10], 1
    %v661 = vld [vmem:[%s660] sm:$0x1]
    %v663 = vlaneseq
    %v664 = vshrl.u32 %v663, 7
    %v665 = vsub.s32 0, %v664
    %v666 = vrot.slane %v661, %v665
    %667 = vrot.lane.b32.xlu0 %v666, 96
    %v668 = vpop.permute.xlu0 %667
    %v670 = vadd.f32 %v659, %v668
    %v671 = vtanh.pop %v670
    %v672 = vsub.f32 1.0, %v569
    %674 = vrot.lane.b32.xlu0 %v671, 64
    %v675 = vpop.permute.xlu0 %674
    %v677 = vmul.f32 %v672, %v675
    %v679 = vmul.f32 %v569, %v495
    %681 = vrot.lane.b32.xlu0 %v679, 32
    %v682 = vpop.permute.xlu0 %681
    %v684 = vadd.f32 %v677, %v682
    %s685 = scalar_lea.vmem [#allocation5], 64
    %v686 = vld [vmem:[%s685] sm:$0xff]
    %v687 = vld [vmem:[%s685 + $0x8] sm:$0xff]
    %v688 = vld [vmem:[%s685 + $0x10] sm:$0xff]
    %v689 = vld [vmem:[%s685 + $0x18] sm:$0xff]
    %s690 = scalar_lea.vmem [#allocation7], 2
    %v691 = vld [vmem:[%s690] sm:$0x1]
    %v693 = vlaneseq
    %v694 = vshrl.u32 %v693, 7
    %v695 = vsub.s32 0, %v694
    %v696 = vrot.slane %v691, %v695
    %699 = vrot.lane.b32.xlu0 %v684, 96
    %v700 = vpop.permute.xlu0 %699
    %v701 = vsel %vm294, %v700, 0
    %703 = vmatprep.subr.mxu0 0.0
    %704 = vmatpush1.msra.mxu0 %v686
    %705 = vmatprep.subr.mxu0 0.0
    %706 = vmatpush1.msra.mxu0 %v687
    %707 = vmatprep.subr.mxu0 0.0
    %708 = vmatpush1.msra.mxu0 %v688
    %709 = vmatprep.subr.mxu0 0.0
    %710 = vmatpush1.msra.mxu0 %v689
    %711 = vmatprep.subr.mxu0 0.0
    %712 = vmatpush1.msra.mxu0 0.0
    %713 = vmatprep.subr.mxu0 0.0
    %714 = vmatpush1.msra.mxu0 0.0
    %715 = vmatprep.subr.mxu0 0.0
    %716 = vmatpush1.msra.mxu0 0.0
    %717 = vmatprep.subr.mxu0 0.0
    %718 = vmatpush1.msra.mxu0 0.0
    %719 = vmatprep.subr.mxu0 0.0
    %720 = vmatpush1.msra.mxu0 0.0
    %721 = vmatprep.subr.mxu0 0.0
    %722 = vmatpush1.msra.mxu0 0.0
    %723 = vmatprep.subr.mxu0 0.0
    %724 = vmatpush1.msra.mxu0 0.0
    %725 = vmatprep.subr.mxu0 0.0
    %726 = vmatpush1.msra.mxu0 0.0
    %727 = vmatprep.subr.mxu0 0.0
    %728 = vmatpush1.msra.mxu0 0.0
    %729 = vmatprep.subr.mxu0 0.0
    %730 = vmatpush1.msra.mxu0 0.0
    %731 = vmatprep.subr.mxu0 0.0
    %732 = vmatpush1.msra.mxu0 0.0
    %733 = vmatprep.subr.mxu0 0.0
    %734 = vmatpush1.msra.mxu0 0.0
    %735 = vmatprep.subr.mxu0 0.0
    %736 = vmatpush1.msra.mxu0 0.0
    %737 = vmatprep.subr.mxu0 0.0
    %738 = vmatpush1.msra.mxu0 0.0
    %739 = vmatprep.subr.mxu0 0.0
    %740 = vmatpush1.msra.mxu0 0.0
    %741 = vmatprep.subr.mxu0 0.0
    %742 = vmatpush1.msra.mxu0 0.0
    %743 = vmatprep.subr.mxu0 0.0
    %744 = vmatpush1.msra.mxu0 0.0
    %745 = vmatprep.subr.mxu0 0.0
    %746 = vmatpush1.msra.mxu0 0.0
    %747 = vmatprep.subr.mxu0 0.0
    %748 = vmatpush1.msra.mxu0 0.0
    %749 = vmatprep.subr.mxu0 0.0
    %750 = vmatpush1.msra.mxu0 0.0
    %751 = vmatprep.subr.mxu0 0.0
    %752 = vmatpush1.msra.mxu0 0.0
    %753 = vmatprep.subr.mxu0 0.0
    %754 = vmatpush1.msra.mxu0 0.0
    %755 = vmatprep.subr.mxu0 0.0
    %756 = vmatpush1.msra.mxu0 0.0
    %757 = vmatprep.subr.mxu0 0.0
    %758 = vmatpush1.msra.mxu0 0.0
    %759 = vmatprep.subr.mxu0 0.0
    %760 = vmatpush1.msra.mxu0 0.0
    %761 = vmatprep.subr.mxu0 0.0
    %762 = vmatpush1.msra.mxu0 0.0
    %763 = vmatprep.subr.mxu0 0.0
    %764 = vmatpush1.msra.mxu0 0.0
    %765 = vmatprep.subr.mxu0 0.0
    %766 = vmatpush1.msra.mxu0 0.0
    %767 = vmatprep.mubr.f32.mxu0 0.0
    %768 = vmatmul.mubr.f32.gmra.mrb[0].mxu0 %v701
    %v769 = vpop.f32.mrb[0].mxu0
    %v770 = vadd.f32 %v696, %v769
    %v771 = vpop.f32.mrb[0].mxu0
    %772 = vdwg.mxu0
    %v773 = vadd.f32 %v281, %v770
    %v774 = vtanh.pop %v773
    %776 = vrot.lane.b32.xlu0 %v774, 96
    %v777 = vpop.permute.xlu0 %776
    %v779 = vmul.f32 %v684, %v777
    %s780 = scalar_lea.vmem [#allocation8], 64
    %v781 = vld [vmem:[%s780] sm:$0xff]
    %v782 = vld [vmem:[%s780 + $0x8] sm:$0xff]
    %v783 = vld [vmem:[%s780 + $0x10] sm:$0xff]
    %v784 = vld [vmem:[%s780 + $0x18] sm:$0xff]
    %786 = vrot.lane.b32.xlu0 %v779, 96
    %v787 = vpop.permute.xlu0 %786
    %v788 = vsel %vm294, %v787, 0
    %790 = vmatprep.subr.mxu0 0.0
    %791 = vmatpush1.msra.mxu0 %v781
    %792 = vmatprep.subr.mxu0 0.0
    %793 = vmatpush1.msra.mxu0 %v782
    %794 = vmatprep.subr.mxu0 0.0
    %795 = vmatpush1.msra.mxu0 %v783
    %796 = vmatprep.subr.mxu0 0.0
    %797 = vmatpush1.msra.mxu0 %v784
    %798 = vmatprep.subr.mxu0 0.0
    %799 = vmatpush1.msra.mxu0 0.0
    %800 = vmatprep.subr.mxu0 0.0
    %801 = vmatpush1.msra.mxu0 0.0
    %802 = vmatprep.subr.mxu0 0.0
    %803 = vmatpush1.msra.mxu0 0.0
    %804 = vmatprep.subr.mxu0 0.0
    %805 = vmatpush1.msra.mxu0 0.0
    %806 = vmatprep.subr.mxu0 0.0
    %807 = vmatpush1.msra.mxu0 0.0
    %808 = vmatprep.subr.mxu0 0.0
    %809 = vmatpush1.msra.mxu0 0.0
    %810 = vmatprep.subr.mxu0 0.0
    %811 = vmatpush1.msra.mxu0 0.0
    %812 = vmatprep.subr.mxu0 0.0
    %813 = vmatpush1.msra.mxu0 0.0
    %814 = vmatprep.subr.mxu0 0.0
    %815 = vmatpush1.msra.mxu0 0.0
    %816 = vmatprep.subr.mxu0 0.0
    %817 = vmatpush1.msra.mxu0 0.0
    %818 = vmatprep.subr.mxu0 0.0
    %819 = vmatpush1.msra.mxu0 0.0
    %820 = vmatprep.subr.mxu0 0.0
    %821 = vmatpush1.msra.mxu0 0.0
    %822 = vmatprep.subr.mxu0 0.0
    %823 = vmatpush1.msra.mxu0 0.0
    %824 = vmatprep.subr.mxu0 0.0
    %825 = vmatpush1.msra.mxu0 0.0
    %826 = vmatprep.subr.mxu0 0.0
    %827 = vmatpush1.msra.mxu0 0.0
    %828 = vmatprep.subr.mxu0 0.0
    %829 = vmatpush1.msra.mxu0 0.0
    %830 = vmatprep.subr.mxu0 0.0
    %831 = vmatpush1.msra.mxu0 0.0
    %832 = vmatprep.subr.mxu0 0.0
    %833 = vmatpush1.msra.mxu0 0.0
    %834 = vmatprep.subr.mxu0 0.0
    %835 = vmatpush1.msra.mxu0 0.0
    %836 = vmatprep.subr.mxu0 0.0
    %837 = vmatpush1.msra.mxu0 0.0
    %838 = vmatprep.subr.mxu0 0.0
    %839 = vmatpush1.msra.mxu0 0.0
    %840 = vmatprep.subr.mxu0 0.0
    %841 = vmatpush1.msra.mxu0 0.0
    %842 = vmatprep.subr.mxu0 0.0
    %843 = vmatpush1.msra.mxu0 0.0
    %844 = vmatprep.subr.mxu0 0.0
    %845 = vmatpush1.msra.mxu0 0.0
    %846 = vmatprep.subr.mxu0 0.0
    %847 = vmatpush1.msra.mxu0 0.0
    %848 = vmatprep.subr.mxu0 0.0
    %849 = vmatpush1.msra.mxu0 0.0
    %850 = vmatprep.subr.mxu0 0.0
    %851 = vmatpush1.msra.mxu0 0.0
    %852 = vmatprep.subr.mxu0 0.0
    %853 = vmatpush1.msra.mxu0 0.0
    %854 = vmatprep.mubr.f32.mxu0 0.0
    %855 = vmatmul.mubr.f32.gmra.mrb[0].mxu0 %v788
    %v856 = vpop.f32.mrb[0].mxu0
    %v857 = vadd.f32 0.0, %v856
    %v858 = vpop.f32.mrb[0].mxu0
    %859 = vdwg.mxu0
    %861 = vrot.lane.b32.xlu0 %v857, 96
    %v862 = vpop.permute.xlu0 %861
    %v864 = vadd.f32 %v773, %v862
    %s865 = scalar_lea.vmem [#allocation10], 2
    %v866 = vld [vmem:[%s865] sm:$0x1]
    %v868 = vlaneseq
    %v869 = vshrl.u32 %v868, 7
    %v870 = vsub.s32 0, %v869
    %v871 = vrot.slane %v866, %v870
    %872 = vrot.lane.b32.xlu0 %v871, 96
    %v873 = vpop.permute.xlu0 %872
    %v875 = vadd.f32 %v864, %v873
    %v876 = vtanh.pop %v875
    %v877 = vsub.f32 1.0, %v774
    %879 = vrot.lane.b32.xlu0 %v876, 64
    %v880 = vpop.permute.xlu0 %879
    %v882 = vmul.f32 %v877, %v880
    %v884 = vmul.f32 %v774, %v700
    %886 = vrot.lane.b32.xlu0 %v884, 32
    %v887 = vpop.permute.xlu0 %886
    %v889 = vadd.f32 %v882, %v887
    %v890 = vld [vmem:[%s7] sm:$0xff]
    %v891 = vld [vmem:[%s7 + $0x8] sm:$0xff]
    %v892 = vld [vmem:[%s7 + $0x10] sm:$0xff]
    %v893 = vld [vmem:[%s7 + $0x18] sm:$0xff]
    %v894 = vld [vmem:[%s8] sm:$0x1]
    %v896 = vlaneseq
    %v897 = vshrl.u32 %v896, 7
    %v898 = vsub.s32 0, %v897
    %v899 = vrot.slane %v894, %v898
    %902 = vrot.lane.b32.xlu0 %v889, 96
    %v903 = vpop.permute.xlu0 %902
    %v904 = vsel %vm294, %v903, 0
    %906 = vmatprep.subr.mxu0 0.0
    %907 = vmatpush1.msra.mxu0 %v890
    %908 = vmatprep.subr.mxu0 0.0
    %909 = vmatpush1.msra.mxu0 %v891
    %910 = vmatprep.subr.mxu0 0.0
    %911 = vmatpush1.msra.mxu0 %v892
    %912 = vmatprep.subr.mxu0 0.0
    %913 = vmatpush1.msra.mxu0 %v893
    %914 = vmatprep.subr.mxu0 0.0
    %915 = vmatpush1.msra.mxu0 0.0
    %916 = vmatprep.subr.mxu0 0.0
    %917 = vmatpush1.msra.mxu0 0.0
    %918 = vmatprep.subr.mxu0 0.0
    %919 = vmatpush1.msra.mxu0 0.0
    %920 = vmatprep.subr.mxu0 0.0
    %921 = vmatpush1.msra.mxu0 0.0
    %922 = vmatprep.subr.mxu0 0.0
    %923 = vmatpush1.msra.mxu0 0.0
    %924 = vmatprep.subr.mxu0 0.0
    %925 = vmatpush1.msra.mxu0 0.0
    %926 = vmatprep.subr.mxu0 0.0
    %927 = vmatpush1.msra.mxu0 0.0
    %928 = vmatprep.subr.mxu0 0.0
    %929 = vmatpush1.msra.mxu0 0.0
    %930 = vmatprep.subr.mxu0 0.0
    %931 = vmatpush1.msra.mxu0 0.0
    %932 = vmatprep.subr.mxu0 0.0
    %933 = vmatpush1.msra.mxu0 0.0
    %934 = vmatprep.subr.mxu0 0.0
    %935 = vmatpush1.msra.mxu0 0.0
    %936 = vmatprep.subr.mxu0 0.0
    %937 = vmatpush1.msra.mxu0 0.0
    %938 = vmatprep.subr.mxu0 0.0
    %939 = vmatpush1.msra.mxu0 0.0
    %940 = vmatprep.subr.mxu0 0.0
    %941 = vmatpush1.msra.mxu0 0.0
    %942 = vmatprep.subr.mxu0 0.0
    %943 = vmatpush1.msra.mxu0 0.0
    %944 = vmatprep.subr.mxu0 0.0
    %945 = vmatpush1.msra.mxu0 0.0
    %946 = vmatprep.subr.mxu0 0.0
    %947 = vmatpush1.msra.mxu0 0.0
    %948 = vmatprep.subr.mxu0 0.0
    %949 = vmatpush1.msra.mxu0 0.0
    %950 = vmatprep.subr.mxu0 0.0
    %951 = vmatpush1.msra.mxu0 0.0
    %952 = vmatprep.subr.mxu0 0.0
    %953 = vmatpush1.msra.mxu0 0.0
    %954 = vmatprep.subr.mxu0 0.0
    %955 = vmatpush1.msra.mxu0 0.0
    %956 = vmatprep.subr.mxu0 0.0
    %957 = vmatpush1.msra.mxu0 0.0
    %958 = vmatprep.subr.mxu0 0.0
    %959 = vmatpush1.msra.mxu0 0.0
    %960 = vmatprep.subr.mxu0 0.0
    %961 = vmatpush1.msra.mxu0 0.0
    %962 = vmatprep.subr.mxu0 0.0
    %963 = vmatpush1.msra.mxu0 0.0
    %964 = vmatprep.subr.mxu0 0.0
    %965 = vmatpush1.msra.mxu0 0.0
    %966 = vmatprep.subr.mxu0 0.0
    %967 = vmatpush1.msra.mxu0 0.0
    %968 = vmatprep.subr.mxu0 0.0
    %969 = vmatpush1.msra.mxu0 0.0
    %970 = vmatprep.mubr.f32.mxu0 0.0
    %971 = vmatmul.mubr.f32.gmra.mrb[0].mxu0 %v904
    %v972 = vpop.f32.mrb[0].mxu0
    %v973 = vadd.f32 %v899, %v972
    %v974 = vpop.f32.mrb[0].mxu0
    %975 = vdwg.mxu0
    %976 = vst [vmem:[#allocation11] sm:$0xff] %v973
    // Predicated region
    $region58: #{tpu_custom_call.1} parent=1 // pred_check
      _
    $region59: #{tpu_custom_call.1} parent=1 // pred_check_branch
      %978 = sbr.rel (0) target = $region61
    $region60: #{tpu_custom_call.1} parent=1 // pred_region
      %s980 = ssub.s32 128, 128
      %981 = vsyncadd [#allocation4], %s980
      %s983 = sshll.u32 [#allocation11], 4
      %s984 = int_to_ptr.vmem [resolvable:$true] %s983
      %986 = dma.vmem_to_hbm [thread:$0]  %s984, 128, %s9, [#allocation4]
    $region61: #{tpu_custom_call.1} parent=1 // pred_fallthru
      _
    // Predicated region
    $region62: #{tpu_custom_call.1} parent=1 // pred_check
      _
    $region63: #{tpu_custom_call.1} parent=1 // pred_check_branch
      %988 = sbr.rel (0) target = $region65
    $region64: #{tpu_custom_call.1} parent=1 // pred_region
      %989 = dma.done [#allocation4], 128
    $region65: #{tpu_custom_call.1} parent=1 // pred_fallthru
      _
    %990 = vsyncpa [#allocation3], 1
    %991 = vsyncpa [#allocation6], 1
    %992 = vsyncpa [#allocation9], 1
    %993 = vsyncpa [#allocation4], 1

</llo_original>
